<compile_context>
chip_gen: v6e
topology: v6e:2x2x1
jax: 0.10.0
libtpu: 0.0.40
codegen_flags: <defaults>
</compile_context>

<pallas_src>
import jax
import jax.numpy as jnp
from jax import lax
from jax.experimental import pallas as pl
from jax.experimental.pallas import tpu as pltpu


_LANE = 128
_SUBLANE = 8
# Total budget for double-buffered (lane-padded) x + out tiles. ~32 MiB keeps the
# whole kernel comfortably under v7x's 64 MiB physical VMEM and is ample on v5e/v6e.
_TILE_VMEM_BUDGET = 32 * 1024 * 1024
_VMEM_LIMIT_BYTES = 48 * 1024 * 1024


def encoder_kernel(x_ref, w_ref, b_ref, out_ref):
    # x: (TILE_B, D); w: (D, 2) [col 0 = mu head, col 1 = log_var head]; b: (1, 2).
    x = x_ref[...].astype(jnp.float32)
    # Single MXU matmul (vext slot) instead of VPU broadcast-mul + XLU lane reduce.
    # MXU is otherwise idle and the kernel is HBM-bound, so HIGHEST precision is free.
    acc = jnp.dot(x, w_ref[...], precision=lax.Precision.HIGHEST,
                  preferred_element_type=jnp.float32)          # (TILE_B, 2)
    out_ref[...] = (acc + b_ref[...]).astype(out_ref.dtype)


def _round_up(v, m):
    return ((v + m - 1) // m) * m


def _choose_tile_b(batch, d, dtype_bytes=4):
    """Pick a batch tile: multiple of 8, sized so the double-buffered lane-padded
    x tile plus the lane-padded (tile_b, 2)->(tile_b, 128) output tile fit in
    _TILE_VMEM_BUDGET; split into >=2 tiles so v7x megacore gets both cores busy."""
    d_pad = _round_up(max(d, 1), _LANE)
    # one x row (lane padded) + one out row (lane padded), each double-buffered
    per_row = (d_pad + _LANE) * dtype_bytes * 2
    rows = max(_SUBLANE, (_TILE_VMEM_BUDGET // per_row) // _SUBLANE * _SUBLANE)
    b_pad = _round_up(batch, _SUBLANE)
    tile_b = min(rows, b_pad)
    # Give the "parallel" grid axis at least 2 steps when the batch is big enough.
    if batch >= 2 * _SUBLANE and pl.cdiv(batch, tile_b) < 2:
        tile_b = _round_up(pl.cdiv(batch, 2), _SUBLANE)
    return tile_b


def pack_encoder_params(w_mu, b_mu, w_log_var, b_log_var):
    """Stack + transpose once at init (outside the hot path):
    w_t: (D, 2) MXU-ready weights, b: (1, 2) biases."""
    w_t = jnp.concatenate([w_mu, w_log_var], axis=0).T   # (D, 2)
    b = jnp.concatenate([b_mu, b_log_var], axis=1)        # (1, 2)
    return w_t, b


@jax.jit
def encoder_forward_packed(x, w_t, b):
    """x: (B, D); w_t: (D, 2); b: (1, 2) -> (mu, log_var), each (B, 1) float32."""
    B, D = x.shape
    tile_b = _choose_tile_b(B, D)
    num_tiles = pl.cdiv(B, tile_b)

    cost = pl.CostEstimate(
        flops=4 * B * D,                      # 2 heads x (mul + add) per element
        transcendentals=0,
        bytes_accessed=B * D * 4 + D * 2 * 4 + 2 * 4 + B * 2 * 4,
    )

    out = pl.pallas_call(
        encoder_kernel,
        out_shape=jax.ShapeDtypeStruct((B, 2), jnp.float32),
        grid=(num_tiles,),
        in_specs=[
            pl.BlockSpec((tile_b, D), lambda i: (i, 0)),   # x: streamed batch tiles
            pl.BlockSpec((D, 2), lambda i: (0, 0)),        # stacked weights: resident
            pl.BlockSpec((1, 2), lambda i: (0, 0)),        # stacked biases: resident
        ],
        out_specs=pl.BlockSpec((tile_b, 2), lambda i: (i, 0)),
        compiler_params=pltpu.CompilerParams(
            dimension_semantics=("parallel",),             # megacore on v7x
            vmem_limit_bytes=_VMEM_LIMIT_BYTES,
        ),
        cost_estimate=cost,
    )(x, w_t, b)

    return out[:, 0:1], out[:, 1:2]


def encoder_forward(x, w_mu, b_mu, w_log_var, b_log_var):
    """Convenience wrapper matching the PyTorch module's parameter layout."""
    w_t, b = pack_encoder_params(w_mu, b_mu, w_log_var, b_log_var)
    return encoder_forward_packed(x, w_t, b)


def init_encoder_params(key, x_dims):
    """Deterministic init mirroring nn.Linear's default U(-1/sqrt(D), 1/sqrt(D))."""
    k1, k2, k3, k4 = jax.random.split(key, 4)
    bound = 1.0 / jnp.sqrt(jnp.float32(x_dims))
    w_mu = jax.random.uniform(k1, (1, x_dims), jnp.float32, -bound, bound)
    b_mu = jax.random.uniform(k2, (1, 1), jnp.float32, -bound, bound)
    w_lv = jax.random.uniform(k3, (1, x_dims), jnp.float32, -bound, bound)
    b_lv = jax.random.uniform(k4, (1, 1), jnp.float32, -bound, bound)
    return w_mu, b_mu, w_lv, b_lv


if __name__ == "__main__":
    key = jax.random.PRNGKey(0)
    k_x, k_p = jax.random.split(key)

    # Small shapes consistent with the module: a batch of x_dims-dim contexts.
    batch, x_dims = 8, 32
    x = jax.random.normal(k_x, (batch, x_dims), jnp.float32)
    w_mu, b_mu, w_lv, b_lv = init_encoder_params(k_p, x_dims)

    mu, log_var = encoder_forward(x, w_mu, b_mu, w_lv, b_lv)
    jax.block_until_ready((mu, log_var))

    # Reference check against plain JAX (same semantics as the PyTorch module).
    mu_ref = jnp.sum(x * w_mu, axis=-1, keepdims=True) + b_mu
    lv_ref = jnp.sum(x * w_lv, axis=-1, keepdims=True) + b_lv
    assert mu.shape == (batch, 1) and log_var.shape == (batch, 1)
    assert jnp.allclose(mu, mu_ref, atol=1e-5)
    assert jnp.allclose(log_var, lv_ref, atol=1e-5)

    # Second check: non-8-multiple batch + non-128 feature dim -> exercises the
    # multi-tile grid and the masked trailing partial block (no padding copy of x).
    batch2, x_dims2 = 50, 96
    k_x2, k_p2 = jax.random.split(jax.random.PRNGKey(1))
    x2 = jax.random.normal(k_x2, (batch2, x_dims2), jnp.float32)
    w_mu2, b_mu2, w_lv2, b_lv2 = init_encoder_params(k_p2, x_dims2)
    w_t2, b2 = pack_encoder_params(w_mu2, b_mu2, w_lv2, b_lv2)
    mu2, lv2 = encoder_forward_packed(x2, w_t2, b2)
    jax.block_until_ready((mu2, lv2))
    mu2_ref = jnp.sum(x2 * w_mu2, axis=-1, keepdims=True) + b_mu2
    lv2_ref = jnp.sum(x2 * w_lv2, axis=-1, keepdims=True) + b_lv2
    assert mu2.shape == (batch2, 1) and lv2.shape == (batch2, 1)
    assert jnp.allclose(mu2, mu2_ref, atol=1e-4)
    assert jnp.allclose(lv2, lv2_ref, atol=1e-4)

    print("KERNEL_OK")
</pallas_src>

<mosaic_0001>
module attributes {stable_mosaic.version = 11 : i64} {
  func.func @encoder_kernel(%arg0: i32, %arg1: memref<8x32xf32, #tpu.memory_space<vmem>>, %arg2: memref<32x2xf32, #tpu.memory_space<vmem>>, %arg3: memref<1x2xf32, #tpu.memory_space<vmem>>, %arg4: memref<8x2xf32, #tpu.memory_space<vmem>>) attributes {dimension_semantics = [#tpu.dimension_semantics<parallel>], iteration_bounds = array<i64: 1>, scalar_prefetch = 0 : i64, scratch_operands = 0 : i64, tpu.core_type = #tpu.core_type<tc>, window_params = [{transform_indices = @transform_0, window_bounds = array<i64: 8, 32>}, {pipeline_mode = #tpu.pipeline_mode<synchronous>, transform_indices = @transform_1, window_bounds = array<i64: 32, 2>}, {pipeline_mode = #tpu.pipeline_mode<synchronous>, transform_indices = @transform_2, window_bounds = array<i64: 1, 2>}, {transform_indices = @transform_3, window_bounds = array<i64: 8, 2>}]} {
    %c0 = arith.constant 0 : index
    %c0_0 = arith.constant 0 : index
    %0 = vector.load %arg1[%c0, %c0_0] : memref<8x32xf32, #tpu.memory_space<vmem>>, vector<8x32xf32>
    %c0_1 = arith.constant 0 : index
    %c0_2 = arith.constant 0 : index
    %1 = vector.load %arg2[%c0_1, %c0_2] : memref<32x2xf32, #tpu.memory_space<vmem>>, vector<32x2xf32>
    %cst = arith.constant dense<0.000000e+00> : vector<8x2xf32>
    %2 = tpu.matmul %0, %1, %cst {dimension_numbers = #tpu.dot_dimension_numbers<[1], [0], [0], [1], [0, 0, 1, 1], [], []>, precision = #tpu.contract_precision<fp32>} : vector<8x32xf32>, vector<32x2xf32>, vector<8x2xf32> -> vector<8x2xf32>
    %c0_3 = arith.constant 0 : index
    %c0_4 = arith.constant 0 : index
    %3 = vector.load %arg3[%c0_3, %c0_4] : memref<1x2xf32, #tpu.memory_space<vmem>>, vector<1x2xf32>
    %4 = vector.broadcast %3 : vector<1x2xf32> to vector<8x2xf32>
    %5 = arith.addf %2, %4 : vector<8x2xf32>
    %c0_5 = arith.constant 0 : index
    %c0_6 = arith.constant 0 : index
    %6 = vector.load %arg4[%c0_5, %c0_6] : memref<8x2xf32, #tpu.memory_space<vmem>>, vector<8x2xf32>
    tpu.vector_store %arg4[%c0_5, %c0_6], %5 {strides = array<i32>} : memref<8x2xf32, #tpu.memory_space<vmem>>, vector<8x2xf32>,
    return
  }
  func.func @transform_0(%arg0: i32) -> (i32, i32) {
    %c0_i32 = arith.constant 0 : i32
    %c0_i32_0 = arith.constant 0 : i32
    return %arg0, %c0_i32 : i32, i32
  }
  func.func @transform_1(%arg0: i32) -> (i32, i32) {
    %c0_i32 = arith.constant 0 : i32
    %c0_i32_0 = arith.constant 0 : i32
    %c0_i32_1 = arith.constant 0 : i32
    return %c0_i32, %c0_i32_0 : i32, i32
  }
  func.func @transform_2(%arg0: i32) -> (i32, i32) {
    %c0_i32 = arith.constant 0 : i32
    %c0_i32_0 = arith.constant 0 : i32
    %c0_i32_1 = arith.constant 0 : i32
    return %c0_i32, %c0_i32_0 : i32, i32
  }
  func.func @transform_3(%arg0: i32) -> (i32, i32) {
    %c0_i32 = arith.constant 0 : i32
    %c0_i32_0 = arith.constant 0 : i32
    return %arg0, %c0_i32 : i32, i32
  }
}

</mosaic_0001>

<llo_original>
// kernel: encoder_forward_packed.1
$region0: #{encoder_forward_packed.1}
  #allocation0 [shape = 'u32[]', space=smem, size = 0x4, offset = 0x4, fixed_abs, tag = 'smem constant byte address 0x4 - core index']
  #allocation1 [shape = 'u32[144,128]{1,0:T(1,128)}', space=vmem, size = 0x12000, scoped, tag = 'internal scratch']
  %s0 = inlined_call_operand.vmem [shape: f32[8,32], index: 0, kind: input, shape index: {}]
  %s1 = inlined_call_operand.vmem [shape: f32[32,2], index: 1, kind: input, shape index: {}]
  %s2 = inlined_call_operand.vmem [shape: f32[1,2], index: 2, kind: input, shape index: {}]
  %s3 = inlined_call_operand.vmem [shape: f32[8,2], index: 3, kind: output, shape index: {}]
  %s4 = sld [smem:[#allocation0]]
  $region22: #{encoder_forward_packed.1} parent=0
    _
  %s6 = ssub.s32 1, %s4
  %s7 = scalar_select 0, %s6, %s4
  // Predicated region
  $region2: #{encoder_forward_packed.1} parent=0 // pred_check
    _
  $region3: #{encoder_forward_packed.1} parent=0 // pred_check_branch
    %9 = sbr.rel (0) target = $region5
  $region4: #{encoder_forward_packed.1} parent=0 // pred_region
    _
  $region5: #{encoder_forward_packed.1} parent=0 // pred_fallthru
    _
  // Predicated region
  $region6: #{encoder_forward_packed.1} parent=0 // pred_check
    _
  $region7: #{encoder_forward_packed.1} parent=0 // pred_check_branch
    %11 = sbr.rel (0) target = $region9
  $region8: #{encoder_forward_packed.1} parent=0 // pred_region
    _
  $region9: #{encoder_forward_packed.1} parent=0 // pred_fallthru
    _
  // Predicated region
  $region10: #{encoder_forward_packed.1} parent=0 // pred_check
    _
  $region11: #{encoder_forward_packed.1} parent=0 // pred_check_branch
    %13 = sbr.rel (0) target = $region13
  $region12: #{encoder_forward_packed.1} parent=0 // pred_region
    _
  $region13: #{encoder_forward_packed.1} parent=0 // pred_fallthru
    _
  %v14 = vld [vmem:[%s0] sm:$0xff]
  %v15 = vld [vmem:[%s1] sm:$0xff]
  %v16 = vld [vmem:[%s1 + $0x8] sm:$0xff]
  %v17 = vld [vmem:[%s1 + $0x10] sm:$0xff]
  %v18 = vld [vmem:[%s1 + $0x18] sm:$0xff]
  %v19 = vld [vmem:[%s2] sm:$0x1]
  %v21 = vlaneseq
  %v22 = vshrl.u32 %v21, 7
  %v23 = vsub.s32 0, %v22
  %v24 = vrot.slane %v19, %v23
  %vm26 = vcmask 261120
  %v28 = vsel %vm26, %v14, 0
  %30 = vmatprep.subr.mxu0 0.0
  %31 = vmatpush1.msra.mxu0 0.0
  %32 = vmatprep.subr.mxu0 0.0
  %33 = vmatpush1.msra.mxu0 0.0
  %34 = vmatprep.subr.mxu0 0.0
  %35 = vmatpush1.msra.mxu0 0.0
  %36 = vmatprep.subr.mxu0 0.0
  %37 = vmatpush1.msra.mxu0 0.0
  %38 = vmatprep.subr.mxu0 0.0
  %39 = vmatpush1.msra.mxu0 0.0
  %40 = vmatprep.subr.mxu0 0.0
  %41 = vmatpush1.msra.mxu0 0.0
  %42 = vmatprep.subr.mxu0 0.0
  %43 = vmatpush1.msra.mxu0 0.0
  %44 = vmatprep.subr.mxu0 0.0
  %45 = vmatpush1.msra.mxu0 0.0
  %46 = vmatprep.subr.mxu0 0.0
  %47 = vmatpush1.msra.mxu0 0.0
  %48 = vmatprep.subr.mxu0 0.0
  %49 = vmatpush1.msra.mxu0 0.0
  %50 = vmatprep.subr.mxu0 0.0
  %51 = vmatpush1.msra.mxu0 0.0
  %52 = vmatprep.subr.mxu0 0.0
  %53 = vmatpush1.msra.mxu0 0.0
  %54 = vmatprep.subr.mxu0 0.0
  %v55 = vand.u32 %v18, 4294901760
  %56 = vmatpush1.msra.mxu0 %v55
  %57 = vmatprep.subr.mxu0 0.0
  %v58 = vand.u32 %v17, 4294901760
  %59 = vmatpush1.msra.mxu0 %v58
  %60 = vmatprep.subr.mxu0 0.0
  %v61 = vand.u32 %v16, 4294901760
  %62 = vmatpush1.msra.mxu0 %v61
  %63 = vmatprep.subr.mxu0 0.0
  %v64 = vand.u32 %v15, 4294901760
  %65 = vmatpush1.msra.mxu0 %v64
  %66 = vmatprep.subr.mxu0 0.0
  %67 = vmatpush2.msra.mxu0 0.0
  %68 = vmatprep.subr.mxu0 0.0
  %69 = vmatpush2.msra.mxu0 0.0
  %70 = vmatprep.subr.mxu0 0.0
  %71 = vmatpush2.msra.mxu0 0.0
  %72 = vmatprep.subr.mxu0 0.0
  %73 = vmatpush2.msra.mxu0 0.0
  %74 = vmatprep.subr.mxu0 0.0
  %75 = vmatpush2.msra.mxu0 0.0
  %76 = vmatprep.subr.mxu0 0.0
  %77 = vmatpush2.msra.mxu0 0.0
  %78 = vmatprep.subr.mxu0 0.0
  %79 = vmatpush2.msra.mxu0 0.0
  %80 = vmatprep.subr.mxu0 0.0
  %81 = vmatpush2.msra.mxu0 0.0
  %82 = vmatprep.subr.mxu0 0.0
  %83 = vmatpush2.msra.mxu0 0.0
  %84 = vmatprep.subr.mxu0 0.0
  %85 = vmatpush2.msra.mxu0 0.0
  %86 = vmatprep.subr.mxu0 0.0
  %87 = vmatpush2.msra.mxu0 0.0
  %88 = vmatprep.subr.mxu0 0.0
  %89 = vmatpush2.msra.mxu0 0.0
  %90 = vmatprep.subr.mxu0 0.0
  %91 = vmatpush2.msra.mxu0 0.0
  %92 = vmatprep.subr.mxu0 0.0
  %93 = vmatpush2.msra.mxu0 0.0
  %94 = vmatprep.subr.mxu0 0.0
  %95 = vmatpush2.msra.mxu0 0.0
  %96 = vmatprep.subr.mxu0 0.0
  %97 = vmatpush2.msra.mxu0 0.0
  %98 = vmatprep.mubr.f32.mxu0 0.0
  %v99 = vand.u32 %v28, 4294901760
  %v100 = vsub.f32 %v28, %v99
  %v101 = vand.u32 %v100, 4294901760
  %v102 = vsub.f32 %v100, %v101
  %v103 = vand.u32 %v102, 4294901760
  %104 = vmatmul.mubr.f32.gmra.mxu0 %v103
  %v105 = vpop.f32.mrf.mxu0
  %v106 = vadd.f32 %v24, %v105
  %v107 = vpop.f32.mrf.mxu0
  %108 = vdwg.mxu0
  %109 = vmatprep.subr.mxu0 0.0
  %110 = vmatpush1.msra.mxu0 0.0
  %111 = vmatprep.subr.mxu0 0.0
  %112 = vmatpush1.msra.mxu0 0.0
  %113 = vmatprep.subr.mxu0 0.0
  %114 = vmatpush1.msra.mxu0 0.0
  %115 = vmatprep.subr.mxu0 0.0
  %116 = vmatpush1.msra.mxu0 0.0
  %117 = vmatprep.subr.mxu0 0.0
  %118 = vmatpush1.msra.mxu0 0.0
  %119 = vmatprep.subr.mxu0 0.0
  %120 = vmatpush1.msra.mxu0 0.0
  %121 = vmatprep.subr.mxu0 0.0
  %122 = vmatpush1.msra.mxu0 0.0
  %123 = vmatprep.subr.mxu0 0.0
  %124 = vmatpush1.msra.mxu0 0.0
  %125 = vmatprep.subr.mxu0 0.0
  %126 = vmatpush1.msra.mxu0 0.0
  %127 = vmatprep.subr.mxu0 0.0
  %128 = vmatpush1.msra.mxu0 0.0
  %129 = vmatprep.subr.mxu0 0.0
  %130 = vmatpush1.msra.mxu0 0.0
  %131 = vmatprep.subr.mxu0 0.0
  %132 = vmatpush1.msra.mxu0 0.0
  %133 = vmatprep.subr.mxu0 0.0
  %v134 = vand.u32 %v18, 4294901760
  %v135 = vsub.f32 %v18, %v134
  %v136 = vand.u32 %v135, 4294901760
  %v137 = vsub.f32 %v135, %v136
  %v138 = vand.u32 %v137, 4294901760
  %139 = vmatpush1.msra.mxu0 %v138
  %140 = vmatprep.subr.mxu0 0.0
  %v141 = vand.u32 %v17, 4294901760
  %v142 = vsub.f32 %v17, %v141
  %v143 = vand.u32 %v142, 4294901760
  %v144 = vsub.f32 %v142, %v143
  %v145 = vand.u32 %v144, 4294901760
  %146 = vmatpush1.msra.mxu0 %v145
  %147 = vmatprep.subr.mxu0 0.0
  %v148 = vand.u32 %v16, 4294901760
  %v149 = vsub.f32 %v16, %v148
  %v150 = vand.u32 %v149, 4294901760
  %v151 = vsub.f32 %v149, %v150
  %v152 = vand.u32 %v151, 4294901760
  %153 = vmatpush1.msra.mxu0 %v152
  %154 = vmatprep.subr.mxu0 0.0
  %v155 = vand.u32 %v15, 4294901760
  %v156 = vsub.f32 %v15, %v155
  %v157 = vand.u32 %v156, 4294901760
  %v158 = vsub.f32 %v156, %v157
  %v159 = vand.u32 %v158, 4294901760
  %160 = vmatpush1.msra.mxu0 %v159
  %161 = vmatprep.subr.mxu0 0.0
  %162 = vmatpush2.msra.mxu0 0.0
  %163 = vmatprep.subr.mxu0 0.0
  %164 = vmatpush2.msra.mxu0 0.0
  %165 = vmatprep.subr.mxu0 0.0
  %166 = vmatpush2.msra.mxu0 0.0
  %167 = vmatprep.subr.mxu0 0.0
  %168 = vmatpush2.msra.mxu0 0.0
  %169 = vmatprep.subr.mxu0 0.0
  %170 = vmatpush2.msra.mxu0 0.0
  %171 = vmatprep.subr.mxu0 0.0
  %172 = vmatpush2.msra.mxu0 0.0
  %173 = vmatprep.subr.mxu0 0.0
  %174 = vmatpush2.msra.mxu0 0.0
  %175 = vmatprep.subr.mxu0 0.0
  %176 = vmatpush2.msra.mxu0 0.0
  %177 = vmatprep.subr.mxu0 0.0
  %178 = vmatpush2.msra.mxu0 0.0
  %179 = vmatprep.subr.mxu0 0.0
  %180 = vmatpush2.msra.mxu0 0.0
  %181 = vmatprep.subr.mxu0 0.0
  %182 = vmatpush2.msra.mxu0 0.0
  %183 = vmatprep.subr.mxu0 0.0
  %184 = vmatpush2.msra.mxu0 0.0
  %185 = vmatprep.subr.mxu0 0.0
  %186 = vmatpush2.msra.mxu0 0.0
  %187 = vmatprep.subr.mxu0 0.0
  %188 = vmatpush2.msra.mxu0 0.0
  %189 = vmatprep.subr.mxu0 0.0
  %190 = vmatpush2.msra.mxu0 0.0
  %191 = vmatprep.subr.mxu0 0.0
  %192 = vmatpush2.msra.mxu0 0.0
  %193 = vmatprep.mubr.f32.mxu0 0.0
  %v194 = vand.u32 %v28, 4294901760
  %195 = vmatmul.mubr.f32.gmra.mxu0 %v194
  %v196 = vpop.f32.mrf.mxu0
  %v197 = vadd.f32 %v106, %v196
  %v198 = vpop.f32.mrf.mxu0
  %199 = vdwg.mxu0
  %200 = vmatprep.subr.mxu0 0.0
  %201 = vmatpush1.msra.mxu0 0.0
  %202 = vmatprep.subr.mxu0 0.0
  %203 = vmatpush1.msra.mxu0 0.0
  %204 = vmatprep.subr.mxu0 0.0
  %205 = vmatpush1.msra.mxu0 0.0
  %206 = vmatprep.subr.mxu0 0.0
  %207 = vmatpush1.msra.mxu0 0.0
  %208 = vmatprep.subr.mxu0 0.0
  %209 = vmatpush1.msra.mxu0 0.0
  %210 = vmatprep.subr.mxu0 0.0
  %211 = vmatpush1.msra.mxu0 0.0
  %212 = vmatprep.subr.mxu0 0.0
  %213 = vmatpush1.msra.mxu0 0.0
  %214 = vmatprep.subr.mxu0 0.0
  %215 = vmatpush1.msra.mxu0 0.0
  %216 = vmatprep.subr.mxu0 0.0
  %217 = vmatpush1.msra.mxu0 0.0
  %218 = vmatprep.subr.mxu0 0.0
  %219 = vmatpush1.msra.mxu0 0.0
  %220 = vmatprep.subr.mxu0 0.0
  %221 = vmatpush1.msra.mxu0 0.0
  %222 = vmatprep.subr.mxu0 0.0
  %223 = vmatpush1.msra.mxu0 0.0
  %224 = vmatprep.subr.mxu0 0.0
  %v225 = vand.u32 %v18, 4294901760
  %v226 = vsub.f32 %v18, %v225
  %227 = vmatpush1.msra.mxu0 %v226
  %228 = vmatprep.subr.mxu0 0.0
  %v229 = vand.u32 %v17, 4294901760
  %v230 = vsub.f32 %v17, %v229
  %231 = vmatpush1.msra.mxu0 %v230
  %232 = vmatprep.subr.mxu0 0.0
  %v233 = vand.u32 %v16, 4294901760
  %v234 = vsub.f32 %v16, %v233
  %235 = vmatpush1.msra.mxu0 %v234
  %236 = vmatprep.subr.mxu0 0.0
  %v237 = vand.u32 %v15, 4294901760
  %v238 = vsub.f32 %v15, %v237
  %239 = vmatpush1.msra.mxu0 %v238
  %240 = vmatprep.subr.mxu0 0.0
  %241 = vmatpush2.msra.mxu0 0.0
  %242 = vmatprep.subr.mxu0 0.0
  %243 = vmatpush2.msra.mxu0 0.0
  %244 = vmatprep.subr.mxu0 0.0
  %245 = vmatpush2.msra.mxu0 0.0
  %246 = vmatprep.subr.mxu0 0.0
  %247 = vmatpush2.msra.mxu0 0.0
  %248 = vmatprep.subr.mxu0 0.0
  %249 = vmatpush2.msra.mxu0 0.0
  %250 = vmatprep.subr.mxu0 0.0
  %251 = vmatpush2.msra.mxu0 0.0
  %252 = vmatprep.subr.mxu0 0.0
  %253 = vmatpush2.msra.mxu0 0.0
  %254 = vmatprep.subr.mxu0 0.0
  %255 = vmatpush2.msra.mxu0 0.0
  %256 = vmatprep.subr.mxu0 0.0
  %257 = vmatpush2.msra.mxu0 0.0
  %258 = vmatprep.subr.mxu0 0.0
  %259 = vmatpush2.msra.mxu0 0.0
  %260 = vmatprep.subr.mxu0 0.0
  %261 = vmatpush2.msra.mxu0 0.0
  %262 = vmatprep.subr.mxu0 0.0
  %263 = vmatpush2.msra.mxu0 0.0
  %264 = vmatprep.subr.mxu0 0.0
  %265 = vmatpush2.msra.mxu0 0.0
  %266 = vmatprep.subr.mxu0 0.0
  %267 = vmatpush2.msra.mxu0 0.0
  %268 = vmatprep.subr.mxu0 0.0
  %269 = vmatpush2.msra.mxu0 0.0
  %270 = vmatprep.subr.mxu0 0.0
  %271 = vmatpush2.msra.mxu0 0.0
  %272 = vmatprep.mubr.f32.mxu0 0.0
  %v273 = vand.u32 %v28, 4294901760
  %v274 = vsub.f32 %v28, %v273
  %275 = vmatmul.mubr.f32.gmra.mxu0 %v274
  %v276 = vpop.f32.mrf.mxu0
  %v277 = vadd.f32 %v197, %v276
  %v278 = vpop.f32.mrf.mxu0
  %279 = vdwg.mxu0
  %280 = vmatprep.subr.mxu0 0.0
  %281 = vmatpush1.msra.mxu0 0.0
  %282 = vmatprep.subr.mxu0 0.0
  %283 = vmatpush1.msra.mxu0 0.0
  %284 = vmatprep.subr.mxu0 0.0
  %285 = vmatpush1.msra.mxu0 0.0
  %286 = vmatprep.subr.mxu0 0.0
  %287 = vmatpush1.msra.mxu0 0.0
  %288 = vmatprep.subr.mxu0 0.0
  %289 = vmatpush1.msra.mxu0 0.0
  %290 = vmatprep.subr.mxu0 0.0
  %291 = vmatpush1.msra.mxu0 0.0
  %292 = vmatprep.subr.mxu0 0.0
  %293 = vmatpush1.msra.mxu0 0.0
  %294 = vmatprep.subr.mxu0 0.0
  %295 = vmatpush1.msra.mxu0 0.0
  %296 = vmatprep.subr.mxu0 0.0
  %297 = vmatpush1.msra.mxu0 0.0
  %298 = vmatprep.subr.mxu0 0.0
  %299 = vmatpush1.msra.mxu0 0.0
  %300 = vmatprep.subr.mxu0 0.0
  %301 = vmatpush1.msra.mxu0 0.0
  %302 = vmatprep.subr.mxu0 0.0
  %303 = vmatpush1.msra.mxu0 0.0
  %304 = vmatprep.subr.mxu0 0.0
  %v305 = vand.u32 %v18, 4294901760
  %306 = vmatpush1.msra.mxu0 %v305
  %307 = vmatprep.subr.mxu0 0.0
  %v308 = vand.u32 %v17, 4294901760
  %309 = vmatpush1.msra.mxu0 %v308
  %310 = vmatprep.subr.mxu0 0.0
  %v311 = vand.u32 %v16, 4294901760
  %312 = vmatpush1.msra.mxu0 %v311
  %313 = vmatprep.subr.mxu0 0.0
  %v314 = vand.u32 %v15, 4294901760
  %315 = vmatpush1.msra.mxu0 %v314
  %316 = vmatprep.subr.mxu0 0.0
  %317 = vmatpush2.msra.mxu0 0.0
  %318 = vmatprep.subr.mxu0 0.0
  %319 = vmatpush2.msra.mxu0 0.0
  %320 = vmatprep.subr.mxu0 0.0
  %321 = vmatpush2.msra.mxu0 0.0
  %322 = vmatprep.subr.mxu0 0.0
  %323 = vmatpush2.msra.mxu0 0.0
  %324 = vmatprep.subr.mxu0 0.0
  %325 = vmatpush2.msra.mxu0 0.0
  %326 = vmatprep.subr.mxu0 0.0
  %327 = vmatpush2.msra.mxu0 0.0
  %328 = vmatprep.subr.mxu0 0.0
  %329 = vmatpush2.msra.mxu0 0.0
  %330 = vmatprep.subr.mxu0 0.0
  %331 = vmatpush2.msra.mxu0 0.0
  %332 = vmatprep.subr.mxu0 0.0
  %333 = vmatpush2.msra.mxu0 0.0
  %334 = vmatprep.subr.mxu0 0.0
  %335 = vmatpush2.msra.mxu0 0.0
  %336 = vmatprep.subr.mxu0 0.0
  %337 = vmatpush2.msra.mxu0 0.0
  %338 = vmatprep.subr.mxu0 0.0
  %339 = vmatpush2.msra.mxu0 0.0
  %340 = vmatprep.subr.mxu0 0.0
  %341 = vmatpush2.msra.mxu0 0.0
  %342 = vmatprep.subr.mxu0 0.0
  %343 = vmatpush2.msra.mxu0 0.0
  %344 = vmatprep.subr.mxu0 0.0
  %345 = vmatpush2.msra.mxu0 0.0
  %346 = vmatprep.subr.mxu0 0.0
  %347 = vmatpush2.msra.mxu0 0.0
  %348 = vmatprep.mubr.f32.mxu0 0.0
  %v349 = vand.u32 %v28, 4294901760
  %v350 = vsub.f32 %v28, %v349
  %v351 = vand.u32 %v350, 4294901760
  %352 = vmatmul.mubr.f32.gmra.mxu0 %v351
  %v353 = vpop.f32.mrf.mxu0
  %v354 = vadd.f32 %v277, %v353
  %v355 = vpop.f32.mrf.mxu0
  %356 = vdwg.mxu0
  %357 = vmatprep.subr.mxu0 0.0
  %358 = vmatpush1.msra.mxu0 0.0
  %359 = vmatprep.subr.mxu0 0.0
  %360 = vmatpush1.msra.mxu0 0.0
  %361 = vmatprep.subr.mxu0 0.0
  %362 = vmatpush1.msra.mxu0 0.0
  %363 = vmatprep.subr.mxu0 0.0
  %364 = vmatpush1.msra.mxu0 0.0
  %365 = vmatprep.subr.mxu0 0.0
  %366 = vmatpush1.msra.mxu0 0.0
  %367 = vmatprep.subr.mxu0 0.0
  %368 = vmatpush1.msra.mxu0 0.0
  %369 = vmatprep.subr.mxu0 0.0
  %370 = vmatpush1.msra.mxu0 0.0
  %371 = vmatprep.subr.mxu0 0.0
  %372 = vmatpush1.msra.mxu0 0.0
  %373 = vmatprep.subr.mxu0 0.0
  %374 = vmatpush1.msra.mxu0 0.0
  %375 = vmatprep.subr.mxu0 0.0
  %376 = vmatpush1.msra.mxu0 0.0
  %377 = vmatprep.subr.mxu0 0.0
  %378 = vmatpush1.msra.mxu0 0.0
  %379 = vmatprep.subr.mxu0 0.0
  %380 = vmatpush1.msra.mxu0 0.0
  %381 = vmatprep.subr.mxu0 0.0
  %v382 = vand.u32 %v18, 4294901760
  %v383 = vsub.f32 %v18, %v382
  %v384 = vand.u32 %v383, 4294901760
  %385 = vmatpush1.msra.mxu0 %v384
  %386 = vmatprep.subr.mxu0 0.0
  %v387 = vand.u32 %v17, 4294901760
  %v388 = vsub.f32 %v17, %v387
  %v389 = vand.u32 %v388, 4294901760
  %390 = vmatpush1.msra.mxu0 %v389
  %391 = vmatprep.subr.mxu0 0.0
  %v392 = vand.u32 %v16, 4294901760
  %v393 = vsub.f32 %v16, %v392
  %v394 = vand.u32 %v393, 4294901760
  %395 = vmatpush1.msra.mxu0 %v394
  %396 = vmatprep.subr.mxu0 0.0
  %v397 = vand.u32 %v15, 4294901760
  %v398 = vsub.f32 %v15, %v397
  %v399 = vand.u32 %v398, 4294901760
  %400 = vmatpush1.msra.mxu0 %v399
  %401 = vmatprep.subr.mxu0 0.0
  %402 = vmatpush2.msra.mxu0 0.0
  %403 = vmatprep.subr.mxu0 0.0
  %404 = vmatpush2.msra.mxu0 0.0
  %405 = vmatprep.subr.mxu0 0.0
  %406 = vmatpush2.msra.mxu0 0.0
  %407 = vmatprep.subr.mxu0 0.0
  %408 = vmatpush2.msra.mxu0 0.0
  %409 = vmatprep.subr.mxu0 0.0
  %410 = vmatpush2.msra.mxu0 0.0
  %411 = vmatprep.subr.mxu0 0.0
  %412 = vmatpush2.msra.mxu0 0.0
  %413 = vmatprep.subr.mxu0 0.0
  %414 = vmatpush2.msra.mxu0 0.0
  %415 = vmatprep.subr.mxu0 0.0
  %416 = vmatpush2.msra.mxu0 0.0
  %417 = vmatprep.subr.mxu0 0.0
  %418 = vmatpush2.msra.mxu0 0.0
  %419 = vmatprep.subr.mxu0 0.0
  %420 = vmatpush2.msra.mxu0 0.0
  %421 = vmatprep.subr.mxu0 0.0
  %422 = vmatpush2.msra.mxu0 0.0
  %423 = vmatprep.subr.mxu0 0.0
  %424 = vmatpush2.msra.mxu0 0.0
  %425 = vmatprep.subr.mxu0 0.0
  %426 = vmatpush2.msra.mxu0 0.0
  %427 = vmatprep.subr.mxu0 0.0
  %428 = vmatpush2.msra.mxu0 0.0
  %429 = vmatprep.subr.mxu0 0.0
  %430 = vmatpush2.msra.mxu0 0.0
  %431 = vmatprep.subr.mxu0 0.0
  %432 = vmatpush2.msra.mxu0 0.0
  %433 = vmatprep.mubr.f32.mxu0 0.0
  %v434 = vand.u32 %v28, 4294901760
  %435 = vmatmul.mubr.f32.gmra.mxu0 %v434
  %v436 = vpop.f32.mrf.mxu0
  %v437 = vadd.f32 %v354, %v436
  %v438 = vpop.f32.mrf.mxu0
  %439 = vdwg.mxu0
  %440 = vmatprep.subr.mxu0 0.0
  %441 = vmatpush1.msra.mxu0 0.0
  %442 = vmatprep.subr.mxu0 0.0
  %443 = vmatpush1.msra.mxu0 0.0
  %444 = vmatprep.subr.mxu0 0.0
  %445 = vmatpush1.msra.mxu0 0.0
  %446 = vmatprep.subr.mxu0 0.0
  %447 = vmatpush1.msra.mxu0 0.0
  %448 = vmatprep.subr.mxu0 0.0
  %449 = vmatpush1.msra.mxu0 0.0
  %450 = vmatprep.subr.mxu0 0.0
  %451 = vmatpush1.msra.mxu0 0.0
  %452 = vmatprep.subr.mxu0 0.0
  %453 = vmatpush1.msra.mxu0 0.0
  %454 = vmatprep.subr.mxu0 0.0
  %455 = vmatpush1.msra.mxu0 0.0
  %456 = vmatprep.subr.mxu0 0.0
  %457 = vmatpush1.msra.mxu0 0.0
  %458 = vmatprep.subr.mxu0 0.0
  %459 = vmatpush1.msra.mxu0 0.0
  %460 = vmatprep.subr.mxu0 0.0
  %461 = vmatpush1.msra.mxu0 0.0
  %462 = vmatprep.subr.mxu0 0.0
  %463 = vmatpush1.msra.mxu0 0.0
  %464 = vmatprep.subr.mxu0 0.0
  %v465 = vand.u32 %v18, 4294901760
  %466 = vmatpush1.msra.mxu0 %v465
  %467 = vmatprep.subr.mxu0 0.0
  %v468 = vand.u32 %v17, 4294901760
  %469 = vmatpush1.msra.mxu0 %v468
  %470 = vmatprep.subr.mxu0 0.0
  %v471 = vand.u32 %v16, 4294901760
  %472 = vmatpush1.msra.mxu0 %v471
  %473 = vmatprep.subr.mxu0 0.0
  %v474 = vand.u32 %v15, 4294901760
  %475 = vmatpush1.msra.mxu0 %v474
  %476 = vmatprep.subr.mxu0 0.0
  %477 = vmatpush2.msra.mxu0 0.0
  %478 = vmatprep.subr.mxu0 0.0
  %479 = vmatpush2.msra.mxu0 0.0
  %480 = vmatprep.subr.mxu0 0.0
  %481 = vmatpush2.msra.mxu0 0.0
  %482 = vmatprep.subr.mxu0 0.0
  %483 = vmatpush2.msra.mxu0 0.0
  %484 = vmatprep.subr.mxu0 0.0
  %485 = vmatpush2.msra.mxu0 0.0
  %486 = vmatprep.subr.mxu0 0.0
  %487 = vmatpush2.msra.mxu0 0.0
  %488 = vmatprep.subr.mxu0 0.0
  %489 = vmatpush2.msra.mxu0 0.0
  %490 = vmatprep.subr.mxu0 0.0
  %491 = vmatpush2.msra.mxu0 0.0
  %492 = vmatprep.subr.mxu0 0.0
  %493 = vmatpush2.msra.mxu0 0.0
  %494 = vmatprep.subr.mxu0 0.0
  %495 = vmatpush2.msra.mxu0 0.0
  %496 = vmatprep.subr.mxu0 0.0
  %497 = vmatpush2.msra.mxu0 0.0
  %498 = vmatprep.subr.mxu0 0.0
  %499 = vmatpush2.msra.mxu0 0.0
  %500 = vmatprep.subr.mxu0 0.0
  %501 = vmatpush2.msra.mxu0 0.0
  %502 = vmatprep.subr.mxu0 0.0
  %503 = vmatpush2.msra.mxu0 0.0
  %504 = vmatprep.subr.mxu0 0.0
  %505 = vmatpush2.msra.mxu0 0.0
  %506 = vmatprep.subr.mxu0 0.0
  %507 = vmatpush2.msra.mxu0 0.0
  %508 = vmatprep.mubr.f32.mxu0 0.0
  %v509 = vand.u32 %v28, 4294901760
  %510 = vmatmul.mubr.f32.gmra.mxu0 %v509
  %v511 = vpop.f32.mrf.mxu0
  %v512 = vadd.f32 %v437, %v511
  %v513 = vpop.f32.mrf.mxu0
  %514 = vdwg.mxu0
  %vm515 = vcmask 15360
  %516 = vst.msk [vmem:[%s3] sm:$0xff] %vm515, %v512
  // Predicated region
  $region14: #{encoder_forward_packed.1} parent=0 // pred_check
    _
  $region15: #{encoder_forward_packed.1} parent=0 // pred_check_branch
    %518 = sbr.rel (0) target = $region17
  $region16: #{encoder_forward_packed.1} parent=0 // pred_region
    _
  $region17: #{encoder_forward_packed.1} parent=0 // pred_fallthru
    _
  // Predicated region
  $region18: #{encoder_forward_packed.1} parent=0 // pred_check
    _
  $region19: #{encoder_forward_packed.1} parent=0 // pred_check_branch
    %520 = sbr.rel (0) target = $region21
  $region20: #{encoder_forward_packed.1} parent=0 // pred_region
    _
  $region21: #{encoder_forward_packed.1} parent=0 // pred_fallthru
    _

</llo_original>
